<compile_context>
chip_gen: v7x
topology: tpu7x:2x2x1
jax: 0.10.0
libtpu: 0.0.40
codegen_flags: <defaults>
</compile_context>

<pallas_src>
import math

import jax
import jax.numpy as jnp
from jax import lax
from jax.experimental import pallas as pl
from jax.experimental.pallas import tpu as pltpu

# Small synthetic problem sizes (module: embeddings (B, D), labels (B,)).
B = 32    # batch (frames)
D = 64    # embed_dim (in_features)
C = 16    # num_classes (out_features)
K = 3     # sub-centers

# Lane-aligned padded sizes used inside the kernel.
DP = 128  # contraction dim padded to one full lane width
CP = 128  # per-sub-center class bank padded to one full lane width

SCALE = 30.0
MARGIN = 0.5
COS_M = math.cos(MARGIN)
SIN_M = math.sin(MARGIN)
TH = math.cos(math.pi - MARGIN)
MM = math.sin(math.pi - MARGIN) * MARGIN
EPS = 1e-12
NEG_BIG = -1e30   # masks padded classes out of the softmax (exp underflows to 0)


def aamsoftmax_ce_kernel(emb_ref, wn_ref, lab_ref, loss_ref):
    # emb_ref : (B, DP)     f32  zero-padded embeddings
    # wn_ref  : (K*CP, DP)  bf16 pre-normalized, bank-major, zero-padded weight
    # lab_ref : (B, 1)      i32  labels
    # loss_ref: (1, 1)      f32  mean cross-entropy (SMEM scalar)

    # --- L2 normalize embeddings: x * rsqrt(max(sum(x^2), eps^2)) ---
    # (zero-padded columns do not change the norm)
    x = emb_ref[...]
    sumsq = jnp.sum(x * x, axis=-1, keepdims=True)
    xn = x * lax.rsqrt(jnp.maximum(sumsq, EPS * EPS))

    # --- one fused MXU matmul over all K sub-center banks (bf16 in, f32 acc) ---
    cos_full = lax.dot_general(
        xn.astype(jnp.bfloat16), wn_ref[...],
        (((1,), (1,)), ((), ())),
        preferred_element_type=jnp.float32)                      # (B, K*CP)

    # --- max over K sub-centers: 128-lane-aligned contiguous slices (VPU max) ---
    cosine = cos_full[:, 0:CP]
    for k in range(1, K):                                        # tiny static unroll
        cosine = jnp.maximum(cosine, cos_full[:, k * CP:(k + 1) * CP])

    # --- additive angular margin (easy_margin=False), all f32 ---
    sine = jnp.sqrt(jnp.clip(1.0 - cosine * cosine, 0.0, 1.0))
    phi = cosine * COS_M - sine * SIN_M
    phi = jnp.where(cosine > TH, phi, cosine - MM)

    labels = lab_ref[...]                                        # (B, 1) i32
    classes = lax.broadcasted_iota(jnp.int32, cosine.shape, 1)   # (B, CP)
    is_tgt = classes == labels                                   # (B, CP) bool

    # select instead of one_hot arithmetic blend; mask padded classes
    logits = jnp.where(is_tgt, phi, cosine) * SCALE
    logits = jnp.where(classes < C, logits, NEG_BIG)

    # --- cross entropy, reduced to its batch mean inside the kernel ---
    m = jnp.max(logits, axis=-1, keepdims=True)
    lse = jnp.log(jnp.sum(jnp.exp(logits - m), axis=-1, keepdims=True)) + m
    tgt = jnp.sum(jnp.where(is_tgt, logits, 0.0), axis=-1, keepdims=True)
    loss_ref[0, 0] = jnp.sum(lse - tgt) * (1.0 / B)


def _prep_weight(weight):
    """torch-layout (C*K, D) weight -> normalized, bank-major, padded (K*CP, DP) bf16.

    torch row c*K + k (sub-center k of class c) maps to bank-major row k*CP + c.
    Normalization is hoisted here so it is done once, not per call tile; padding
    rows/columns are exact zeros (masked out of the softmax in the kernel).
    """
    sumsq = jnp.sum(weight * weight, axis=-1, keepdims=True)
    wn = weight * lax.rsqrt(jnp.maximum(sumsq, EPS * EPS))          # (C*K, D) f32
    wn = jnp.transpose(wn.reshape(C, K, D), (1, 0, 2))              # (K, C, D)
    wn = jnp.pad(wn, ((0, 0), (0, CP - C), (0, DP - D)))            # (K, CP, DP)
    return wn.reshape(K * CP, DP).astype(jnp.bfloat16)


def pyannote_aamsoftmax_loss(embeddings, weight, labels):
    """embeddings: (B, D) f32; weight: (C*K, D) f32 (torch layout); labels: (B,) int."""
    wn = _prep_weight(weight)                                        # (K*CP, DP) bf16
    emb = jnp.pad(embeddings, ((0, 0), (0, DP - D)))                 # (B, DP) f32
    labels_2d = labels.astype(jnp.int32).reshape(B, 1)

    cost = pl.CostEstimate(
        flops=2 * B * (K * CP) * DP,
        transcendentals=B * CP,
        bytes_accessed=emb.size * 4 + wn.size * 2 + labels_2d.size * 4 + 4)

    loss = pl.pallas_call(
        aamsoftmax_ce_kernel,
        out_shape=jax.ShapeDtypeStruct((1, 1), jnp.float32),
        in_specs=[pl.BlockSpec(memory_space=pltpu.MemorySpace.VMEM),
                  pl.BlockSpec(memory_space=pltpu.MemorySpace.VMEM),
                  pl.BlockSpec(memory_space=pltpu.MemorySpace.VMEM)],
        out_specs=pl.BlockSpec(memory_space=pltpu.MemorySpace.SMEM),
        cost_estimate=cost,
    )(emb, wn, labels_2d)
    return loss[0, 0]


# ----------------------------- references -----------------------------------

def reference_loss_f32(embeddings, weight, labels):
    """Exact pure-JAX mirror of the PyTorch forward (full f32)."""
    xn = embeddings / jnp.maximum(
        jnp.linalg.norm(embeddings, axis=-1, keepdims=True), EPS)
    wn = weight / jnp.maximum(
        jnp.linalg.norm(weight, axis=-1, keepdims=True), EPS)
    cosine = xn @ wn.T                                   # (B, C*K), torch layout
    cosine = jnp.max(cosine.reshape(-1, C, K), axis=2)   # (B, C)
    sine = jnp.sqrt(jnp.clip(1.0 - cosine ** 2, 0.0, 1.0))
    phi = cosine * COS_M - sine * SIN_M
    phi = jnp.where(cosine > TH, phi, cosine - MM)
    one_hot = jax.nn.one_hot(labels, C, dtype=jnp.float32)
    logits = (one_hot * phi + (1.0 - one_hot) * cosine) * SCALE
    logp = jax.nn.log_softmax(logits, axis=-1)
    return -jnp.mean(jnp.sum(one_hot * logp, axis=-1))


def reference_loss_matched(embeddings, weight, labels):
    """Same math with the kernel's precision choices (bf16 matmul inputs, f32 acc)."""
    sumsq = jnp.sum(embeddings * embeddings, axis=-1, keepdims=True)
    xn = embeddings * lax.rsqrt(jnp.maximum(sumsq, EPS * EPS))
    wsq = jnp.sum(weight * weight, axis=-1, keepdims=True)
    wn = (weight * lax.rsqrt(jnp.maximum(wsq, EPS * EPS))).astype(jnp.bfloat16)
    cos = jnp.dot(xn.astype(jnp.bfloat16), wn.T,
                  preferred_element_type=jnp.float32)               # (B, C*K)
    cosine = jnp.max(cos.reshape(-1, C, K), axis=2)                 # (B, C)
    sine = jnp.sqrt(jnp.clip(1.0 - cosine ** 2, 0.0, 1.0))
    phi = cosine * COS_M - sine * SIN_M
    phi = jnp.where(cosine > TH, phi, cosine - MM)
    one_hot = jax.nn.one_hot(labels, C, dtype=jnp.float32)
    logits = (one_hot * phi + (1.0 - one_hot) * cosine) * SCALE
    logp = jax.nn.log_softmax(logits, axis=-1)
    return -jnp.mean(jnp.sum(one_hot * logp, axis=-1))


if __name__ == "__main__":
    key = jax.random.PRNGKey(0)
    k1, k2, k3 = jax.random.split(key, 3)

    embeddings = jax.random.normal(k1, (B, D), dtype=jnp.float32)
    # xavier_uniform_ for weight (C*K, D): U(-a, a), a = sqrt(6 / (fan_in + fan_out))
    bound = math.sqrt(6.0 / (D + C * K))
    weight = jax.random.uniform(k2, (C * K, D), minval=-bound, maxval=bound,
                                dtype=jnp.float32)
    labels = jax.random.randint(k3, (B,), 0, C)

    loss = pyannote_aamsoftmax_loss(embeddings, weight, labels)
    jax.block_until_ready(loss)

    ref_matched = reference_loss_matched(embeddings, weight, labels)
    ref_f32 = reference_loss_f32(embeddings, weight, labels)

    # Tight check vs. a reference with identical precision choices.
    assert jnp.allclose(loss, ref_matched, atol=1e-4, rtol=1e-4), (loss, ref_matched)
    # Loose sanity check vs. the exact f32 PyTorch-semantics reference
    # (difference is only the bf16 MXU-input rounding).
    assert jnp.allclose(loss, ref_f32, atol=5e-2, rtol=5e-2), (loss, ref_f32)

    print("KERNEL_OK")
</pallas_src>

<mosaic_0001>
module attributes {stable_mosaic.version = 11 : i64} {
  func.func @aamsoftmax_ce_kernel(%arg0: memref<32x128xf32, #tpu.memory_space<vmem>>, %arg1: memref<384x128xbf16, #tpu.memory_space<vmem>>, %arg2: memref<32x1xi32, #tpu.memory_space<vmem>>, %arg3: memref<1x1xf32, #tpu.memory_space<smem>>) attributes {dimension_semantics = [], scalar_prefetch = 0 : i64, scratch_operands = 0 : i64, tpu.core_type = #tpu.core_type<tc>} {
    %c0 = arith.constant 0 : index
    %c0_0 = arith.constant 0 : index
    %0 = vector.load %arg0[%c0, %c0_0] : memref<32x128xf32, #tpu.memory_space<vmem>>, vector<32x128xf32>
    %1 = arith.mulf %0, %0 : vector<32x128xf32>
    %cst = arith.constant dense<0.000000e+00> : vector<32xf32>
    %2 = vector.multi_reduction <add>, %1, %cst [1] : vector<32x128xf32> to vector<32xf32>
    %3 = vector.shape_cast %2 : vector<32xf32> to vector<32x1xf32>
    %cst_1 = arith.constant 1.000000e-24 : f32
    %4 = vector.broadcast %cst_1 : f32 to vector<32x1xf32>
    %5 = arith.maximumf %3, %4 : vector<32x1xf32>
    %6 = math.rsqrt %5 : vector<32x1xf32>
    %7 = vector.broadcast %6 : vector<32x1xf32> to vector<32x128xf32>
    %8 = arith.mulf %0, %7 : vector<32x128xf32>
    %9 = arith.truncf %8 : vector<32x128xf32> to vector<32x128xbf16>
    %c0_2 = arith.constant 0 : index
    %c0_3 = arith.constant 0 : index
    %10 = vector.load %arg1[%c0_2, %c0_3] : memref<384x128xbf16, #tpu.memory_space<vmem>>, vector<384x128xbf16>
    %cst_4 = arith.constant dense<0.000000e+00> : vector<32x384xf32>
    %11 = tpu.matmul %9, %10, %cst_4 {dimension_numbers = #tpu.dot_dimension_numbers<[1], [1], [0], [0], [0, 0, 1, 0], [], []>} : vector<32x128xbf16>, vector<384x128xbf16>, vector<32x384xf32> -> vector<32x384xf32>
    %12 = vector.extract_strided_slice %11 {offsets = [0, 0], sizes = [32, 128], strides = [1, 1]} : vector<32x384xf32> to vector<32x128xf32>
    %13 = vector.extract_strided_slice %11 {offsets = [0, 128], sizes = [32, 128], strides = [1, 1]} : vector<32x384xf32> to vector<32x128xf32>
    %14 = arith.maximumf %12, %13 : vector<32x128xf32>
    %15 = vector.extract_strided_slice %11 {offsets = [0, 256], sizes = [32, 128], strides = [1, 1]} : vector<32x384xf32> to vector<32x128xf32>
    %16 = arith.maximumf %14, %15 : vector<32x128xf32>
    %17 = arith.mulf %16, %16 : vector<32x128xf32>
    %cst_5 = arith.constant 1.000000e+00 : f32
    %18 = vector.broadcast %cst_5 : f32 to vector<32x128xf32>
    %19 = arith.subf %18, %17 : vector<32x128xf32>
    %cst_6 = arith.constant 0.000000e+00 : f32
    %cst_7 = arith.constant 1.000000e+00 : f32
    %20 = vector.broadcast %cst_6 : f32 to vector<32x128xf32>
    %21 = arith.maximumf %20, %19 : vector<32x128xf32>
    %22 = vector.broadcast %cst_7 : f32 to vector<32x128xf32>
    %23 = arith.minimumf %22, %21 : vector<32x128xf32>
    %24 = math.sqrt %23 : vector<32x128xf32>
    %cst_8 = arith.constant 0.87758255 : f32
    %25 = vector.broadcast %cst_8 : f32 to vector<32x128xf32>
    %26 = arith.mulf %16, %25 : vector<32x128xf32>
    %cst_9 = arith.constant 0.47942555 : f32
    %27 = vector.broadcast %cst_9 : f32 to vector<32x128xf32>
    %28 = arith.mulf %24, %27 : vector<32x128xf32>
    %29 = arith.subf %26, %28 : vector<32x128xf32>
    %cst_10 = arith.constant -0.87758255 : f32
    %30 = vector.broadcast %cst_10 : f32 to vector<32x128xf32>
    %31 = arith.cmpf ogt, %16, %30 : vector<32x128xf32>
    %cst_11 = arith.constant 0.239712775 : f32
    %32 = vector.broadcast %cst_11 : f32 to vector<32x128xf32>
    %33 = arith.subf %16, %32 : vector<32x128xf32>
    %34 = arith.select %31, %29, %33 : vector<32x128xi1>, vector<32x128xf32>
    %c0_12 = arith.constant 0 : index
    %c0_13 = arith.constant 0 : index
    %35 = vector.load %arg2[%c0_12, %c0_13] : memref<32x1xi32, #tpu.memory_space<vmem>>, vector<32x1xi32>
    %36 = tpu.iota {dimensions = array<i32: 1>} : vector<32x128xi32>
    %37 = vector.broadcast %35 : vector<32x1xi32> to vector<32x128xi32>
    %38 = arith.cmpi eq, %36, %37 : vector<32x128xi32>
    %39 = arith.select %38, %34, %16 : vector<32x128xi1>, vector<32x128xf32>
    %cst_14 = arith.constant 3.000000e+01 : f32
    %40 = vector.broadcast %cst_14 : f32 to vector<32x128xf32>
    %41 = arith.mulf %39, %40 : vector<32x128xf32>
    %c16_i32 = arith.constant 16 : i32
    %42 = vector.broadcast %c16_i32 : i32 to vector<32x128xi32>
    %43 = arith.cmpi slt, %36, %42 : vector<32x128xi32>
    %cst_15 = arith.constant -1.000000e+30 : f32
    %44 = vector.broadcast %cst_15 : f32 to vector<32x128xf32>
    %45 = arith.select %43, %41, %44 : vector<32x128xi1>, vector<32x128xf32>
    %cst_16 = arith.constant dense<0xFF800000> : vector<32xf32>
    %46 = vector.multi_reduction <maximumf>, %45, %cst_16 [1] : vector<32x128xf32> to vector<32xf32>
    %47 = vector.shape_cast %46 : vector<32xf32> to vector<32x1xf32>
    %48 = vector.broadcast %47 : vector<32x1xf32> to vector<32x128xf32>
    %49 = arith.subf %45, %48 : vector<32x128xf32>
    %50 = math.exp %49 : vector<32x128xf32>
    %cst_17 = arith.constant dense<0.000000e+00> : vector<32xf32>
    %51 = vector.multi_reduction <add>, %50, %cst_17 [1] : vector<32x128xf32> to vector<32xf32>
    %52 = vector.shape_cast %51 : vector<32xf32> to vector<32x1xf32>
    %53 = math.log %52 : vector<32x1xf32>
    %54 = arith.addf %53, %47 : vector<32x1xf32>
    %cst_18 = arith.constant 0.000000e+00 : f32
    %55 = vector.broadcast %cst_18 : f32 to vector<32x128xf32>
    %56 = arith.select %38, %45, %55 : vector<32x128xi1>, vector<32x128xf32>
    %cst_19 = arith.constant dense<0.000000e+00> : vector<32xf32>
    %57 = vector.multi_reduction <add>, %56, %cst_19 [1] : vector<32x128xf32> to vector<32xf32>
    %58 = vector.shape_cast %57 : vector<32xf32> to vector<32x1xf32>
    %59 = arith.subf %54, %58 : vector<32x1xf32>
    %60 = vector.shape_cast %59 : vector<32x1xf32> to vector<1x32x1xf32>
    %cst_20 = arith.constant dense<0.000000e+00> : vector<1xf32>
    %61 = vector.multi_reduction <add>, %60, %cst_20 [1, 2] : vector<1x32x1xf32> to vector<1xf32>
    %62 = vector.shape_cast %61 : vector<1xf32> to vector<1x1x1xf32>
    %63 = vector.extract %62[0, 0, 0] : f32 from vector<1x1x1xf32>
    %cst_21 = arith.constant 3.125000e-02 : f32
    %64 = arith.mulf %63, %cst_21 : f32
    %c0_22 = arith.constant 0 : index
    %c0_23 = arith.constant 0 : index
    %65 = memref.load %arg3[%c0_22, %c0_23] : memref<1x1xf32, #tpu.memory_space<smem>>
    memref.store %64, %arg3[%c0_22, %c0_23] : memref<1x1xf32, #tpu.memory_space<smem>>
    return
  }
}

</mosaic_0001>

<llo_original>
// kernel: tpu_custom_call.1
$region0: #{tpu_custom_call.1}
  #allocation0 [shape = 'u32[]', space=smem, size = 0x4, offset = 0x4, fixed_abs, tag = 'smem constant byte address 0x4 - core index']
  #allocation1 [shape = 'u32[144,128]{1,0:T(1,128)}', space=vmem, size = 0x12000, scoped, tag = 'internal scratch']
  %s0 = inlined_call_operand.vmem [shape: f32[32,128], index: 0, kind: input, shape index: {}]
  %s1 = inlined_call_operand.hbm [shape: bf16[384,128], index: 1, kind: input, shape index: {}]
  %s2 = inlined_call_operand.vmem [shape: s32[32,1], index: 2, kind: input, shape index: {}]
  %s3 = inlined_call_operand.hbm [shape: f32[1,1], index: 3, kind: output, shape index: {}]
  %s4 = sld [smem:[#allocation0]]
  $region26: #{tpu_custom_call.1} parent=0
    _
  %s6 = ssub.s32 1, %s4
  %s7 = scalar_select 0, %s6, %s4
  $region1: #{tpu_custom_call.1} parent=0
    #allocation2 [shape = 'u8[98304]{0}', space=vmem, size = 0x18000, scoped, tag = 'input window, operand 1, single buffered']
    #allocation3 [shape = 's32[1]{0}', space=sflag, size = 0x4, scoped, tag = 'scoped memory for tpu_custom_call.1']
    #allocation4 [shape = 's32[1]{0}', space=sflag, size = 0x4, scoped, tag = 'scoped memory for tpu_custom_call.1']
    #allocation5 [shape = 'u8[512]{0}', space=smem, size = 0x200, scoped, tag = 'output window, operand 0, single buffered']
    %8 = vsyncpa [#allocation3], 0
    %9 = vsyncpa [#allocation4], 0
    // Predicated region
    $region2: #{tpu_custom_call.1} parent=1 // pred_check
      _
    $region3: #{tpu_custom_call.1} parent=1 // pred_check_branch
      %11 = sbr.rel (0) target = $region5
    $region4: #{tpu_custom_call.1} parent=1 // pred_region
      _
    $region5: #{tpu_custom_call.1} parent=1 // pred_fallthru
      _
    // Predicated region
    $region6: #{tpu_custom_call.1} parent=1 // pred_check
      _
    $region7: #{tpu_custom_call.1} parent=1 // pred_check_branch
      %13 = sbr.rel (0) target = $region9
    $region8: #{tpu_custom_call.1} parent=1 // pred_region
      %s15 = ssub.s32 3072, 3072
      %16 = vsyncadd [#allocation3], %s15
      %s17 = sshll.u32 [#allocation2], 4
      %s18 = int_to_ptr.vmem [resolvable:$true] %s17
      %23 = dma.hbm_to_vmem [thread:$0]  %s1, 3072, %s18, [#allocation3], 64, 64, 4
    $region9: #{tpu_custom_call.1} parent=1 // pred_fallthru
      _
    // Predicated region
    $region10: #{tpu_custom_call.1} parent=1 // pred_check
      _
    $region11: #{tpu_custom_call.1} parent=1 // pred_check_branch
      %25 = sbr.rel (0) target = $region13
    $region12: #{tpu_custom_call.1} parent=1 // pred_region
      _
    $region13: #{tpu_custom_call.1} parent=1 // pred_fallthru
      _
    // Predicated region
    $region14: #{tpu_custom_call.1} parent=1 // pred_check
      _
    $region15: #{tpu_custom_call.1} parent=1 // pred_check_branch
      %27 = sbr.rel (0) target = $region17
    $region16: #{tpu_custom_call.1} parent=1 // pred_region
      %28 = dma.done [#allocation3], 3072
    $region17: #{tpu_custom_call.1} parent=1 // pred_fallthru
      _
    %v30 = vld [vmem:[%s0] sm:$0xff]
    %v31 = vld [vmem:[%s0 + $0x8] sm:$0xff]
    %v32 = vld [vmem:[%s0 + $0x10] sm:$0xff]
    %v33 = vld [vmem:[%s0 + $0x18] sm:$0xff]
    %v34 = vmul.f32 %v30, %v30
    %v35 = vmul.f32 %v31, %v31
    %v36 = vmul.f32 %v32, %v32
    %v37 = vmul.f32 %v33, %v33
    %38 = vadd.xlane.f32.xlu0 %v34
    %v39 = vpop.xlane.xlu0 %38
    %40 = vadd.xlane.f32.xlu0 %v35
    %v41 = vpop.xlane.xlu0 %40
    %42 = vadd.xlane.f32.xlu0 %v36
    %v43 = vpop.xlane.xlu0 %42
    %44 = vadd.xlane.f32.xlu0 %v37
    %v45 = vpop.xlane.xlu0 %44
    %v46 = vmax.f32 %v39, 1e-24
    %v47 = vmax.f32 %v41, 1e-24
    %v48 = vmax.f32 %v43, 1e-24
    %v49 = vmax.f32 %v45, 1e-24
    %v50 = vrsqrt.pop %v46
    %v51 = vrsqrt.pop %v47
    %v52 = vrsqrt.pop %v48
    %v53 = vrsqrt.pop %v49
    %v54 = vmul.f32 %v30, %v50
    %v55 = vmul.f32 %v31, %v51
    %v56 = vmul.f32 %v32, %v52
    %v57 = vmul.f32 %v33, %v53
    %v58 = vpack.c.bf16 %v55, %v54
    %v59 = vpack.c.bf16 %v57, %v56
    %v60 = vld [vmem:[#allocation2] sm:$0xf]
    %v61 = vld [vmem:[#allocation2 + $0x4] sm:$0xf]
    %v62 = vld [vmem:[#allocation2 + $0x8] sm:$0xf]
    %v63 = vld [vmem:[#allocation2 + $0xc] sm:$0xf]
    %v64 = vld [vmem:[#allocation2 + $0x10] sm:$0xf]
    %v65 = vld [vmem:[#allocation2 + $0x14] sm:$0xf]
    %v66 = vld [vmem:[#allocation2 + $0x18] sm:$0xf]
    %v67 = vld [vmem:[#allocation2 + $0x1c] sm:$0xf]
    %v68 = vld [vmem:[#allocation2 + $0x20] sm:$0xf]
    %v69 = vld [vmem:[#allocation2 + $0x24] sm:$0xf]
    %v70 = vld [vmem:[#allocation2 + $0x28] sm:$0xf]
    %v71 = vld [vmem:[#allocation2 + $0x2c] sm:$0xf]
    %v72 = vld [vmem:[#allocation2 + $0x30] sm:$0xf]
    %v73 = vld [vmem:[#allocation2 + $0x34] sm:$0xf]
    %v74 = vld [vmem:[#allocation2 + $0x38] sm:$0xf]
    %v75 = vld [vmem:[#allocation2 + $0x3c] sm:$0xf]
    %v76 = vld [vmem:[#allocation2 + $0x40] sm:$0xf]
    %v77 = vld [vmem:[#allocation2 + $0x44] sm:$0xf]
    %v78 = vld [vmem:[#allocation2 + $0x48] sm:$0xf]
    %v79 = vld [vmem:[#allocation2 + $0x4c] sm:$0xf]
    %v80 = vld [vmem:[#allocation2 + $0x50] sm:$0xf]
    %v81 = vld [vmem:[#allocation2 + $0x54] sm:$0xf]
    %v82 = vld [vmem:[#allocation2 + $0x58] sm:$0xf]
    %v83 = vld [vmem:[#allocation2 + $0x5c] sm:$0xf]
    %v84 = vld [vmem:[#allocation2 + $0x60] sm:$0xf]
    %v85 = vld [vmem:[#allocation2 + $0x64] sm:$0xf]
    %v86 = vld [vmem:[#allocation2 + $0x68] sm:$0xf]
    %v87 = vld [vmem:[#allocation2 + $0x6c] sm:$0xf]
    %v88 = vld [vmem:[#allocation2 + $0x70] sm:$0xf]
    %v89 = vld [vmem:[#allocation2 + $0x74] sm:$0xf]
    %v90 = vld [vmem:[#allocation2 + $0x78] sm:$0xf]
    %v91 = vld [vmem:[#allocation2 + $0x7c] sm:$0xf]
    %v92 = vld [vmem:[#allocation2 + $0x80] sm:$0xf]
    %v93 = vld [vmem:[#allocation2 + $0x84] sm:$0xf]
    %v94 = vld [vmem:[#allocation2 + $0x88] sm:$0xf]
    %v95 = vld [vmem:[#allocation2 + $0x8c] sm:$0xf]
    %v96 = vld [vmem:[#allocation2 + $0x90] sm:$0xf]
    %v97 = vld [vmem:[#allocation2 + $0x94] sm:$0xf]
    %v98 = vld [vmem:[#allocation2 + $0x98] sm:$0xf]
    %v99 = vld [vmem:[#allocation2 + $0x9c] sm:$0xf]
    %v100 = vld [vmem:[#allocation2 + $0xa0] sm:$0xf]
    %v101 = vld [vmem:[#allocation2 + $0xa4] sm:$0xf]
    %v102 = vld [vmem:[#allocation2 + $0xa8] sm:$0xf]
    %v103 = vld [vmem:[#allocation2 + $0xac] sm:$0xf]
    %v104 = vld [vmem:[#allocation2 + $0xb0] sm:$0xf]
    %v105 = vld [vmem:[#allocation2 + $0xb4] sm:$0xf]
    %v106 = vld [vmem:[#allocation2 + $0xb8] sm:$0xf]
    %v107 = vld [vmem:[#allocation2 + $0xbc] sm:$0xf]
    %v156 = vunpack.c.l.b16 %v60
    %v157 = vunpack.c.l.b16 %v61
    %v158 = vunpack.c.l.b16 %v62
    %v159 = vunpack.c.l.b16 %v63
    %v160 = vunpack.c.l.b16 %v64
    %v161 = vunpack.c.l.b16 %v65
    %v162 = vunpack.c.l.b16 %v66
    %v163 = vunpack.c.l.b16 %v67
    %v164 = vunpack.c.l.b16 %v68
    %v165 = vunpack.c.l.b16 %v69
    %v166 = vunpack.c.l.b16 %v70
    %v167 = vunpack.c.l.b16 %v71
    %v168 = vunpack.c.l.b16 %v72
    %v169 = vunpack.c.l.b16 %v73
    %v170 = vunpack.c.l.b16 %v74
    %v171 = vunpack.c.l.b16 %v75
    %v172 = vunpack.c.l.b16 %v76
    %v173 = vunpack.c.l.b16 %v77
    %v174 = vunpack.c.l.b16 %v78
    %v175 = vunpack.c.l.b16 %v79
    %v176 = vunpack.c.l.b16 %v80
    %v177 = vunpack.c.l.b16 %v81
    %v178 = vunpack.c.l.b16 %v82
    %v179 = vunpack.c.l.b16 %v83
    %v180 = vunpack.c.l.b16 %v84
    %v181 = vunpack.c.l.b16 %v85
    %v182 = vunpack.c.l.b16 %v86
    %v183 = vunpack.c.l.b16 %v87
    %v184 = vunpack.c.l.b16 %v88
    %v185 = vunpack.c.l.b16 %v89
    %v186 = vunpack.c.l.b16 %v90
    %v187 = vunpack.c.l.b16 %v91
    %v188 = vunpack.c.l.b16 %v92
    %v189 = vunpack.c.l.b16 %v93
    %v190 = vunpack.c.l.b16 %v94
    %v191 = vunpack.c.l.b16 %v95
    %v192 = vunpack.c.l.b16 %v96
    %v193 = vunpack.c.l.b16 %v97
    %v194 = vunpack.c.l.b16 %v98
    %v195 = vunpack.c.l.b16 %v99
    %v196 = vunpack.c.l.b16 %v100
    %v197 = vunpack.c.l.b16 %v101
    %v198 = vunpack.c.l.b16 %v102
    %v199 = vunpack.c.l.b16 %v103
    %v200 = vunpack.c.l.b16 %v104
    %v201 = vunpack.c.l.b16 %v105
    %v202 = vunpack.c.l.b16 %v106
    %v203 = vunpack.c.l.b16 %v107
    %v204 = vpack.c.b16 %v157, %v156
    %v205 = vpack.c.b16 %v159, %v158
    %v206 = vpack.c.b16 %v161, %v160
    %v207 = vpack.c.b16 %v163, %v162
    %v208 = vpack.c.b16 %v165, %v164
    %v209 = vpack.c.b16 %v167, %v166
    %v210 = vpack.c.b16 %v169, %v168
    %v211 = vpack.c.b16 %v171, %v170
    %v212 = vpack.c.b16 %v173, %v172
    %v213 = vpack.c.b16 %v175, %v174
    %v214 = vpack.c.b16 %v177, %v176
    %v215 = vpack.c.b16 %v179, %v178
    %v216 = vpack.c.b16 %v181, %v180
    %v217 = vpack.c.b16 %v183, %v182
    %v218 = vpack.c.b16 %v185, %v184
    %v219 = vpack.c.b16 %v187, %v186
    %v220 = vpack.c.b16 %v189, %v188
    %v221 = vpack.c.b16 %v191, %v190
    %v222 = vpack.c.b16 %v193, %v192
    %v223 = vpack.c.b16 %v195, %v194
    %v224 = vpack.c.b16 %v197, %v196
    %v225 = vpack.c.b16 %v199, %v198
    %v226 = vpack.c.b16 %v201, %v200
    %v227 = vpack.c.b16 %v203, %v202
    %252 = vmatprep.subr.bf16.mxu0 0
    %253 = vmatpush1.bf16.xpose.msra.mxu0 %v204
    %254 = vmatprep.subr.bf16.mxu0 0
    %255 = vmatpush1.bf16.xpose.msra.mxu0 %v205
    %256 = vmatprep.subr.bf16.mxu0 0
    %257 = vmatpush1.bf16.xpose.msra.mxu0 %v206
    %258 = vmatprep.subr.bf16.mxu0 0
    %259 = vmatpush1.bf16.xpose.msra.mxu0 %v207
    %260 = vmatprep.subr.bf16.mxu0 0
    %261 = vmatpush1.bf16.xpose.msra.mxu0 %v208
    %262 = vmatprep.subr.bf16.mxu0 0
    %263 = vmatpush1.bf16.xpose.msra.mxu0 %v209
    %264 = vmatprep.subr.bf16.mxu0 0
    %265 = vmatpush1.bf16.xpose.msra.mxu0 %v210
    %266 = vmatprep.subr.bf16.mxu0 0
    %267 = vmatpush1.bf16.xpose.msra.mxu0 %v211
    %268 = vmatprep.subr.bf16.mxu0 0
    %269 = vmatpush1.bf16.xpose.msra.mxu0 %v212
    %270 = vmatprep.subr.bf16.mxu0 0
    %271 = vmatpush1.bf16.xpose.msra.mxu0 %v213
    %272 = vmatprep.subr.bf16.mxu0 0
    %273 = vmatpush1.bf16.xpose.msra.mxu0 %v214
    %274 = vmatprep.subr.bf16.mxu0 0
    %275 = vmatpush1.bf16.xpose.msra.mxu0 %v215
    %276 = vmatprep.subr.bf16.mxu0 0
    %277 = vmatpush1.bf16.xpose.msra.mxu0 %v216
    %278 = vmatprep.subr.bf16.mxu0 0
    %279 = vmatpush1.bf16.xpose.msra.mxu0 %v217
    %280 = vmatprep.subr.bf16.mxu0 0
    %281 = vmatpush1.bf16.xpose.msra.mxu0 %v218
    %282 = vmatprep.subr.bf16.mxu0 0
    %283 = vmatpush1.bf16.xpose.msra.mxu0 %v219
    %284 = vmatprep.mubr.bf16.mxu0 0
    %285 = vmatmul.mubr.bf16.gmra.mrb[0].mxu0 %v58
    %v286 = vpop.f32.mrb[0].mxu0
    %v287 = vadd.f32 0.0, %v286
    %v288 = vpop.f32.mrb[0].mxu0
    %v289 = vadd.f32 0.0, %v288
    %v290 = vpop.f32.mrb[0].mxu0
    %v291 = vadd.f32 0.0, %v290
    %v292 = vpop.f32.mrb[0].mxu0
    %v293 = vadd.f32 0.0, %v292
    %294 = vmatprep.mubr.bf16.mxu0 0
    %295 = vmatmul.mubr.bf16.gmra.mrb[0].mxu0 %v59
    %v296 = vpop.f32.mrb[0].mxu0
    %v297 = vadd.f32 0.0, %v296
    %v298 = vpop.f32.mrb[0].mxu0
    %v299 = vadd.f32 0.0, %v298
    %v300 = vpop.f32.mrb[0].mxu0
    %v301 = vadd.f32 0.0, %v300
    %v302 = vpop.f32.mrb[0].mxu0
    %v303 = vadd.f32 0.0, %v302
    %304 = vdwg.mxu0
    %305 = vmatprep.subr.bf16.mxu0 0
    %306 = vmatpush1.bf16.xpose.msra.mxu0 %v220
    %307 = vmatprep.subr.bf16.mxu0 0
    %308 = vmatpush1.bf16.xpose.msra.mxu0 %v221
    %309 = vmatprep.subr.bf16.mxu0 0
    %310 = vmatpush1.bf16.xpose.msra.mxu0 %v222
    %311 = vmatprep.subr.bf16.mxu0 0
    %312 = vmatpush1.bf16.xpose.msra.mxu0 %v223
    %313 = vmatprep.subr.bf16.mxu0 0
    %314 = vmatpush1.bf16.xpose.msra.mxu0 %v224
    %315 = vmatprep.subr.bf16.mxu0 0
    %316 = vmatpush1.bf16.xpose.msra.mxu0 %v225
    %317 = vmatprep.subr.bf16.mxu0 0
    %318 = vmatpush1.bf16.xpose.msra.mxu0 %v226
    %319 = vmatprep.subr.bf16.mxu0 0
    %320 = vmatpush1.bf16.xpose.msra.mxu0 %v227
    %321 = vmatprep.subr.bf16.mxu0 0
    %322 = vmatpush1.bf16.xpose.msra.mxu0 0
    %323 = vmatprep.subr.bf16.mxu0 0
    %324 = vmatpush1.bf16.xpose.msra.mxu0 0
    %325 = vmatprep.subr.bf16.mxu0 0
    %326 = vmatpush1.bf16.xpose.msra.mxu0 0
    %327 = vmatprep.subr.bf16.mxu0 0
    %328 = vmatpush1.bf16.xpose.msra.mxu0 0
    %329 = vmatprep.subr.bf16.mxu0 0
    %330 = vmatpush1.bf16.xpose.msra.mxu0 0
    %331 = vmatprep.subr.bf16.mxu0 0
    %332 = vmatpush1.bf16.xpose.msra.mxu0 0
    %333 = vmatprep.subr.bf16.mxu0 0
    %334 = vmatpush1.bf16.xpose.msra.mxu0 0
    %335 = vmatprep.subr.bf16.mxu0 0
    %336 = vmatpush1.bf16.xpose.msra.mxu0 0
    %337 = vmatprep.mubr.bf16.mxu0 0
    %338 = vmatmul.mubr.bf16.gmra.mrb[0].mxu0 %v58
    %v339 = vpop.f32.mrb[0].mxu0
    %v340 = vadd.f32 0.0, %v339
    %v341 = vpop.f32.mrb[0].mxu0
    %v342 = vpop.f32.mrb[0].mxu0
    %v343 = vadd.f32 0.0, %v342
    %v344 = vpop.f32.mrb[0].mxu0
    %345 = vmatprep.mubr.bf16.mxu0 0
    %346 = vmatmul.mubr.bf16.gmra.mrb[0].mxu0 %v59
    %v347 = vpop.f32.mrb[0].mxu0
    %v348 = vadd.f32 0.0, %v347
    %v349 = vpop.f32.mrb[0].mxu0
    %v350 = vpop.f32.mrb[0].mxu0
    %v351 = vadd.f32 0.0, %v350
    %v352 = vpop.f32.mrb[0].mxu0
    %353 = vdwg.mxu0
    %v354 = vmax.f32 %v287, %v289
    %v355 = vmax.f32 %v291, %v293
    %v356 = vmax.f32 %v297, %v299
    %v357 = vmax.f32 %v301, %v303
    %v358 = vmax.f32 %v354, %v340
    %v359 = vmax.f32 %v355, %v343
    %v360 = vmax.f32 %v356, %v348
    %v361 = vmax.f32 %v357, %v351
    %v362 = vmul.f32 %v358, %v358
    %v363 = vmul.f32 %v359, %v359
    %v364 = vmul.f32 %v360, %v360
    %v365 = vmul.f32 %v361, %v361
    %v366 = vsub.f32 1.0, %v362
    %v367 = vsub.f32 1.0, %v363
    %v368 = vsub.f32 1.0, %v364
    %v369 = vsub.f32 1.0, %v365
    %v370 = vmax.f32 %v366, 0.0
    %v371 = vmax.f32 %v367, 0.0
    %v372 = vmax.f32 %v368, 0.0
    %v373 = vmax.f32 %v369, 0.0
    %v374 = vmin.f32 %v370, 1.0
    %v375 = vmin.f32 %v371, 1.0
    %v376 = vmin.f32 %v372, 1.0
    %v377 = vmin.f32 %v373, 1.0
    %v378 = vrsqrt.pop %v374
    %v379 = vmul.f32 %v374, %v378
    %vm380 = vcmp.eq.f32.partialorder %v374, inf
    %v381 = vsel %vm380, %v374, %v379
    %vm382 = vcmp.eq.f32.partialorder %v374, 0.0
    %v383 = vand.u32 %v374, 2147483648
    %v384 = vsel %vm382, %v383, %v381
    %v385 = vrsqrt.pop %v375
    %v386 = vmul.f32 %v375, %v385
    %vm387 = vcmp.eq.f32.partialorder %v375, inf
    %v388 = vsel %vm387, %v375, %v386
    %vm389 = vcmp.eq.f32.partialorder %v375, 0.0
    %v390 = vand.u32 %v375, 2147483648
    %v391 = vsel %vm389, %v390, %v388
    %v392 = vrsqrt.pop %v376
    %v393 = vmul.f32 %v376, %v392
    %vm394 = vcmp.eq.f32.partialorder %v376, inf
    %v395 = vsel %vm394, %v376, %v393
    %vm396 = vcmp.eq.f32.partialorder %v376, 0.0
    %v397 = vand.u32 %v376, 2147483648
    %v398 = vsel %vm396, %v397, %v395
    %v399 = vrsqrt.pop %v377
    %v400 = vmul.f32 %v377, %v399
    %vm401 = vcmp.eq.f32.partialorder %v377, inf
    %v402 = vsel %vm401, %v377, %v400
    %vm403 = vcmp.eq.f32.partialorder %v377, 0.0
    %v404 = vand.u32 %v377, 2147483648
    %v405 = vsel %vm403, %v404, %v402
    %v406 = vmul.f32 %v358, 0.87758255
    %v407 = vmul.f32 %v359, 0.87758255
    %v408 = vmul.f32 %v360, 0.87758255
    %v409 = vmul.f32 %v361, 0.87758255
    %v410 = vmul.f32 %v384, 0.47942555
    %v411 = vmul.f32 %v391, 0.47942555
    %v412 = vmul.f32 %v398, 0.47942555
    %v413 = vmul.f32 %v405, 0.47942555
    %v414 = vsub.f32 %v406, %v410
    %v415 = vsub.f32 %v407, %v411
    %v416 = vsub.f32 %v408, %v412
    %v417 = vsub.f32 %v409, %v413
    %vm418 = vcmp.gt.f32.partialorder %v358, -0.87758255
    %vm419 = vcmp.gt.f32.partialorder %v359, -0.87758255
    %vm420 = vcmp.gt.f32.partialorder %v360, -0.87758255
    %vm421 = vcmp.gt.f32.partialorder %v361, -0.87758255
    %v422 = vsub.f32 %v358, 0.23971277
    %v423 = vsub.f32 %v359, 0.23971277
    %v424 = vsub.f32 %v360, 0.23971277
    %v425 = vsub.f32 %v361, 0.23971277
    %v426 = vsel %vm418, %v414, %v422
    %v427 = vsel %vm419, %v415, %v423
    %v428 = vsel %vm420, %v416, %v424
    %v429 = vsel %vm421, %v417, %v425
    %v430 = vld [vmem:[%s2] sm:$0xff]
    %v431 = vld [vmem:[%s2 + $0x8] sm:$0xff]
    %v432 = vld [vmem:[%s2 + $0x10] sm:$0xff]
    %v433 = vld [vmem:[%s2 + $0x18] sm:$0xff]
    %v434 = vlaneseq
    %v435 = vand.u32 %v434, 127
    %436 = vset.pattern.permute.xlu0 0
    %437 = vperm.xlu0 %436, %v430
    %v438 = vpop.permute.xlu0 %437
    %439 = vset.pattern.permute.xlu0 0
    %440 = vperm.xlu0 %439, %v431
    %v441 = vpop.permute.xlu0 %440
    %442 = vset.pattern.permute.xlu0 0
    %443 = vperm.xlu0 %442, %v432
    %v444 = vpop.permute.xlu0 %443
    %445 = vset.pattern.permute.xlu0 0
    %446 = vperm.xlu0 %445, %v433
    %v447 = vpop.permute.xlu0 %446
    %vm448 = vcmp.eq.s32.totalorder %v435, %v438
    %vm449 = vcmp.eq.s32.totalorder %v435, %v441
    %vm450 = vcmp.eq.s32.totalorder %v435, %v444
    %vm451 = vcmp.eq.s32.totalorder %v435, %v447
    %v452 = vsel %vm448, %v426, %v358
    %v453 = vsel %vm449, %v427, %v359
    %v454 = vsel %vm450, %v428, %v360
    %v455 = vsel %vm451, %v429, %v361
    %v456 = vmul.f32 %v452, 30.0
    %v457 = vmul.f32 %v453, 30.0
    %v458 = vmul.f32 %v454, 30.0
    %v459 = vmul.f32 %v455, 30.0
    %vm460 = vcmp.lt.s32.totalorder %v435, 16
    %v461 = vsel %vm460, %v456, -1e+30
    %v462 = vsel %vm460, %v457, -1e+30
    %v463 = vsel %vm460, %v458, -1e+30
    %v464 = vsel %vm460, %v459, -1e+30
    %465 = vmax.xlane.f32.xlu0 %v461
    %v466 = vpop.xlane.xlu0 %465
    %467 = vmax.xlane.f32.xlu0 %v462
    %v468 = vpop.xlane.xlu0 %467
    %469 = vmax.xlane.f32.xlu0 %v463
    %v470 = vpop.xlane.xlu0 %469
    %471 = vmax.xlane.f32.xlu0 %v464
    %v472 = vpop.xlane.xlu0 %471
    %v473 = vsub.f32 %v461, %v466
    %v474 = vsub.f32 %v462, %v468
    %v475 = vsub.f32 %v463, %v470
    %v476 = vsub.f32 %v464, %v472
    %v477 = vmul.f32 %v473, 1.442695
    %v478 = vpow.pop %v477
    %v479 = vmul.f32 %v474, 1.442695
    %v480 = vpow.pop %v479
    %v481 = vmul.f32 %v475, 1.442695
    %v482 = vpow.pop %v481
    %v483 = vmul.f32 %v476, 1.442695
    %v484 = vpow.pop %v483
    %485 = vadd.xlane.f32.xlu0 %v478
    %v486 = vpop.xlane.xlu0 %485
    %487 = vadd.xlane.f32.xlu0 %v480
    %v488 = vpop.xlane.xlu0 %487
    %489 = vadd.xlane.f32.xlu0 %v482
    %v490 = vpop.xlane.xlu0 %489
    %491 = vadd.xlane.f32.xlu0 %v484
    %v492 = vpop.xlane.xlu0 %491
    %v493 = vlog2.pop %v486
    %v494 = vmul.f32 %v493, 0.6931472
    %v495 = vlog2.pop %v488
    %v496 = vmul.f32 %v495, 0.6931472
    %v497 = vlog2.pop %v490
    %v498 = vmul.f32 %v497, 0.6931472
    %v499 = vlog2.pop %v492
    %v500 = vmul.f32 %v499, 0.6931472
    %v501 = vadd.f32 %v494, %v466
    %v502 = vadd.f32 %v496, %v468
    %v503 = vadd.f32 %v498, %v470
    %v504 = vadd.f32 %v500, %v472
    %v505 = vsel %vm448, %v461, 0.0
    %v506 = vsel %vm449, %v462, 0.0
    %v507 = vsel %vm450, %v463, 0.0
    %v508 = vsel %vm451, %v464, 0.0
    %509 = vadd.xlane.f32.xlu0 %v505
    %v510 = vpop.xlane.xlu0 %509
    %511 = vadd.xlane.f32.xlu0 %v506
    %v512 = vpop.xlane.xlu0 %511
    %513 = vadd.xlane.f32.xlu0 %v507
    %v514 = vpop.xlane.xlu0 %513
    %515 = vadd.xlane.f32.xlu0 %v508
    %v516 = vpop.xlane.xlu0 %515
    %v517 = vsub.f32 %v501, %v510
    %v518 = vsub.f32 %v502, %v512
    %v519 = vsub.f32 %v503, %v514
    %v520 = vsub.f32 %v504, %v516
    %vm521 = vcmask 7168
    %v522 = vsel %vm521, %v517, 0.0
    %v523 = vsel %vm521, %v518, 0.0
    %v524 = vadd.f32 %v522, %v523
    %v525 = vsel %vm521, %v519, 0.0
    %v526 = vadd.f32 %v524, %v525
    %v527 = vsel %vm521, %v520, 0.0
    %v528 = vadd.f32 %v526, %v527
    %529 = vadd.xlane.f32.xlu0 %v528
    %v530 = vpop.xlane.xlu0 %529
    %v531 = vrot.slane %v530, 4
    %v532 = vadd.f32 %v530, %v531
    %v533 = vrot.slane %v532, 2
    %v534 = vadd.f32 %v532, %v533
    %v535 = vrot.slane %v534, 1
    %v536 = vadd.f32 %v534, %v535
    %s537 = vtos %v536
    %s538 = smul.f32 %s537, 0.03125
    %s539 = scalar_lea.smem [#allocation5], 0
    %540 = sst [smem:[%s539]] %s538
    // Predicated region
    $region18: #{tpu_custom_call.1} parent=1 // pred_check
      _
    $region19: #{tpu_custom_call.1} parent=1 // pred_check_branch
      %542 = sbr.rel (0) target = $region21
    $region20: #{tpu_custom_call.1} parent=1 // pred_region
      %s544 = ssub.s32 16, 16
      %545 = vsyncadd [#allocation4], %s544
      %548 = dma.smem_to_hbm [#allocation5], 16, %s3, [#allocation4]
    $region21: #{tpu_custom_call.1} parent=1 // pred_fallthru
      _
    // Predicated region
    $region22: #{tpu_custom_call.1} parent=1 // pred_check
      _
    $region23: #{tpu_custom_call.1} parent=1 // pred_check_branch
      %550 = sbr.rel (0) target = $region25
    $region24: #{tpu_custom_call.1} parent=1 // pred_region
      %551 = dma.done [#allocation4], 16
    $region25: #{tpu_custom_call.1} parent=1 // pred_fallthru
      _
    %552 = sfence
    %553 = vsyncpa [#allocation3], 1
    %554 = vsyncpa [#allocation4], 1

</llo_original>
